<compile_context>
chip_gen: v7x
topology: tpu7x:2x2x1
jax: 0.10.0
libtpu: 0.0.40
codegen_flags: <defaults>
</compile_context>

<pallas_src>
import jax
import jax.numpy as jnp
from jax.experimental import pallas as pl
from jax.experimental.pallas import tpu as pltpu


def _elemwise_psum_kernel(x_ref, x1_ref, x2_ref, x3_ref, x4_ref, psum_ref):
    x = x_ref[...]
    x1_ref[...] = x + 1.0
    x2_ref[...] = x - 1.0
    x3_ref[...] = x * 2.0
    x4_ref[...] = x * 0.5  # exact for floats; avoids the divide path
    # Per-block partial sum in f32, reduced over sublanes only; the final
    # lane reduction across all blocks is finished in plain JAX.
    psum_ref[...] = jnp.sum(x.astype(jnp.float32), axis=0, keepdims=True)


def pt_module_forward(x, *, lane=1024, max_tile_rows=256):
    """Pallas implementation of PtModule.forward.

    Returns (x+1, x-1, x*2, x/2, total_sum) matching the PyTorch module.
    """
    orig_shape = x.shape
    dtype = x.dtype
    total = x.size

    flat = x.reshape(-1)
    rows = -(-total // lane)                 # cdiv(total, lane)
    tile_r = min(max_tile_rows, rows)        # full-extent block for small inputs
    num_tiles = -(-rows // tile_r)           # cdiv(rows, tile_r)
    rows_padded = num_tiles * tile_r
    padded_total = rows_padded * lane
    if padded_total != total:
        # Zero padding: sliced off for the elementwise outputs, neutral for sum.
        flat = jnp.pad(flat, (0, padded_total - total))
    x2d = flat.reshape(rows_padded, lane)

    elem_shape = jax.ShapeDtypeStruct((rows_padded, lane), dtype)
    out_shapes = (
        elem_shape,                                             # x + 1
        elem_shape,                                             # x - 1
        elem_shape,                                             # x * 2
        elem_shape,                                             # x / 2
        jax.ShapeDtypeStruct((num_tiles, lane), jnp.float32),   # partial sums
    )

    tile_spec = pl.BlockSpec((tile_r, lane), lambda i: (i, 0))
    psum_spec = pl.BlockSpec((1, lane), lambda i: (i, 0))

    x1p, x2p, x3p, x4p, psums = pl.pallas_call(
        _elemwise_psum_kernel,
        out_shape=out_shapes,
        grid=(num_tiles,),
        in_specs=[tile_spec],
        out_specs=(tile_spec, tile_spec, tile_spec, tile_spec, psum_spec),
        compiler_params=pltpu.CompilerParams(
            dimension_semantics=("parallel",)),
    )(x2d)

    def _unpad(a):
        return a.reshape(-1)[:total].reshape(orig_shape)

    sum_result = jnp.sum(psums)  # finish reduction of per-block partial sums
    return _unpad(x1p), _unpad(x2p), _unpad(x3p), _unpad(x4p), sum_result


if __name__ == "__main__":
    key = jax.random.PRNGKey(0)

    # Shape implied by the module (NCHW-ish): batch=2, channels=4, 16x16.
    x = jax.random.normal(key, (2, 4, 16, 16), dtype=jnp.float32)
    x1, x2, x3, x4, s = jax.block_until_ready(pt_module_forward(x))

    assert jnp.allclose(x1, x + 1.0)
    assert jnp.allclose(x2, x - 1.0)
    assert jnp.allclose(x3, x * 2.0)
    assert jnp.allclose(x4, x / 2.0)
    assert jnp.allclose(s, jnp.sum(x), rtol=1e-5, atol=1e-5)

    # Extra check: a shape whose element count needs zero-padding to the slab.
    key2 = jax.random.PRNGKey(0)
    y = jax.random.normal(key2, (2, 3, 33, 35), dtype=jnp.float32)
    y1, y2, y3, y4, sy = jax.block_until_ready(pt_module_forward(y))
    assert jnp.allclose(y1, y + 1.0)
    assert jnp.allclose(y2, y - 1.0)
    assert jnp.allclose(y3, y * 2.0)
    assert jnp.allclose(y4, y / 2.0)
    assert jnp.allclose(sy, jnp.sum(y), rtol=1e-5, atol=1e-5)

    print("KERNEL_OK")
</pallas_src>

<mosaic_0001>
module attributes {stable_mosaic.version = 11 : i64} {
  func.func @_elemwise_psum_kernel(%arg0: i32, %arg1: memref<2x1024xf32, #tpu.memory_space<vmem>>, %arg2: memref<2x1024xf32, #tpu.memory_space<vmem>>, %arg3: memref<2x1024xf32, #tpu.memory_space<vmem>>, %arg4: memref<2x1024xf32, #tpu.memory_space<vmem>>, %arg5: memref<2x1024xf32, #tpu.memory_space<vmem>>, %arg6: memref<1x1024xf32, #tpu.memory_space<vmem>>) attributes {dimension_semantics = [#tpu.dimension_semantics<parallel>], iteration_bounds = array<i64: 1>, scalar_prefetch = 0 : i64, scratch_operands = 0 : i64, tpu.core_type = #tpu.core_type<tc>, window_params = [{transform_indices = @transform_0, window_bounds = array<i64: 2, 1024>}, {transform_indices = @transform_1, window_bounds = array<i64: 2, 1024>}, {transform_indices = @transform_2, window_bounds = array<i64: 2, 1024>}, {transform_indices = @transform_3, window_bounds = array<i64: 2, 1024>}, {transform_indices = @transform_4, window_bounds = array<i64: 2, 1024>}, {transform_indices = @transform_5, window_bounds = array<i64: 1, 1024>}]} {
    %c0 = arith.constant 0 : index
    %c0_0 = arith.constant 0 : index
    %0 = vector.load %arg1[%c0, %c0_0] : memref<2x1024xf32, #tpu.memory_space<vmem>>, vector<2x1024xf32>
    %cst = arith.constant 1.000000e+00 : f32
    %1 = vector.broadcast %cst : f32 to vector<2x1024xf32>
    %2 = arith.addf %0, %1 : vector<2x1024xf32>
    %c0_1 = arith.constant 0 : index
    %c0_2 = arith.constant 0 : index
    %3 = vector.load %arg2[%c0_1, %c0_2] : memref<2x1024xf32, #tpu.memory_space<vmem>>, vector<2x1024xf32>
    tpu.vector_store %arg2[%c0_1, %c0_2], %2 {strides = array<i32>} : memref<2x1024xf32, #tpu.memory_space<vmem>>, vector<2x1024xf32>,
    %cst_3 = arith.constant 1.000000e+00 : f32
    %4 = vector.broadcast %cst_3 : f32 to vector<2x1024xf32>
    %5 = arith.subf %0, %4 : vector<2x1024xf32>
    %c0_4 = arith.constant 0 : index
    %c0_5 = arith.constant 0 : index
    %6 = vector.load %arg3[%c0_4, %c0_5] : memref<2x1024xf32, #tpu.memory_space<vmem>>, vector<2x1024xf32>
    tpu.vector_store %arg3[%c0_4, %c0_5], %5 {strides = array<i32>} : memref<2x1024xf32, #tpu.memory_space<vmem>>, vector<2x1024xf32>,
    %cst_6 = arith.constant 2.000000e+00 : f32
    %7 = vector.broadcast %cst_6 : f32 to vector<2x1024xf32>
    %8 = arith.mulf %0, %7 : vector<2x1024xf32>
    %c0_7 = arith.constant 0 : index
    %c0_8 = arith.constant 0 : index
    %9 = vector.load %arg4[%c0_7, %c0_8] : memref<2x1024xf32, #tpu.memory_space<vmem>>, vector<2x1024xf32>
    tpu.vector_store %arg4[%c0_7, %c0_8], %8 {strides = array<i32>} : memref<2x1024xf32, #tpu.memory_space<vmem>>, vector<2x1024xf32>,
    %cst_9 = arith.constant 5.000000e-01 : f32
    %10 = vector.broadcast %cst_9 : f32 to vector<2x1024xf32>
    %11 = arith.mulf %0, %10 : vector<2x1024xf32>
    %c0_10 = arith.constant 0 : index
    %c0_11 = arith.constant 0 : index
    %12 = vector.load %arg5[%c0_10, %c0_11] : memref<2x1024xf32, #tpu.memory_space<vmem>>, vector<2x1024xf32>
    tpu.vector_store %arg5[%c0_10, %c0_11], %11 {strides = array<i32>} : memref<2x1024xf32, #tpu.memory_space<vmem>>, vector<2x1024xf32>,
    %cst_12 = arith.constant dense<0.000000e+00> : vector<1024xf32>
    %13 = vector.multi_reduction <add>, %0, %cst_12 [0] : vector<2x1024xf32> to vector<1024xf32>
    %14 = vector.shape_cast %13 : vector<1024xf32> to vector<1x1024xf32>
    %c0_13 = arith.constant 0 : index
    %c0_14 = arith.constant 0 : index
    %15 = vector.load %arg6[%c0_13, %c0_14] : memref<1x1024xf32, #tpu.memory_space<vmem>>, vector<1x1024xf32>
    tpu.vector_store %arg6[%c0_13, %c0_14], %14 {strides = array<i32>} : memref<1x1024xf32, #tpu.memory_space<vmem>>, vector<1x1024xf32>,
    return
  }
  func.func @transform_0(%arg0: i32) -> (i32, i32) {
    %c0_i32 = arith.constant 0 : i32
    %c0_i32_0 = arith.constant 0 : i32
    return %arg0, %c0_i32 : i32, i32
  }
  func.func @transform_1(%arg0: i32) -> (i32, i32) {
    %c0_i32 = arith.constant 0 : i32
    %c0_i32_0 = arith.constant 0 : i32
    return %arg0, %c0_i32 : i32, i32
  }
  func.func @transform_2(%arg0: i32) -> (i32, i32) {
    %c0_i32 = arith.constant 0 : i32
    %c0_i32_0 = arith.constant 0 : i32
    return %arg0, %c0_i32 : i32, i32
  }
  func.func @transform_3(%arg0: i32) -> (i32, i32) {
    %c0_i32 = arith.constant 0 : i32
    %c0_i32_0 = arith.constant 0 : i32
    return %arg0, %c0_i32 : i32, i32
  }
  func.func @transform_4(%arg0: i32) -> (i32, i32) {
    %c0_i32 = arith.constant 0 : i32
    %c0_i32_0 = arith.constant 0 : i32
    return %arg0, %c0_i32 : i32, i32
  }
  func.func @transform_5(%arg0: i32) -> (i32, i32) {
    %c0_i32 = arith.constant 0 : i32
    %c0_i32_0 = arith.constant 0 : i32
    return %arg0, %c0_i32 : i32, i32
  }
}

</mosaic_0001>

<llo_original>
// kernel: tpu_custom_call.1
$region0: #{tpu_custom_call.1}
  #allocation0 [shape = 'u32[]', space=smem, size = 0x4, offset = 0x4, fixed_abs, tag = 'smem constant byte address 0x4 - core index']
  #allocation1 [shape = 'u32[144,128]{1,0:T(1,128)}', space=vmem, size = 0x12000, scoped, tag = 'internal scratch']
  %s0 = inlined_call_operand.hbm [shape: f32[2,1024], index: 0, kind: input, shape index: {}]
  %s1 = inlined_call_operand.hbm [shape: f32[2,1024], index: 1, kind: output, shape index: {0}]
  %s2 = inlined_call_operand.hbm [shape: f32[2,1024], index: 2, kind: output, shape index: {1}]
  %s3 = inlined_call_operand.hbm [shape: f32[2,1024], index: 3, kind: output, shape index: {2}]
  %s4 = inlined_call_operand.hbm [shape: f32[2,1024], index: 4, kind: output, shape index: {3}]
  %s5 = inlined_call_operand.hbm [shape: f32[1,1024], index: 5, kind: output, shape index: {4}]
  %6 = xla_tuple %s1, %s2, %s3, %s4, %s5
  %s7 = sld [smem:[#allocation0]]
  $region50: #{tpu_custom_call.1} parent=0
    _
  %s9 = ssub.s32 1, %s7
  %s10 = scalar_select 0, %s9, %s7
  $region1: #{tpu_custom_call.1} parent=0
    #allocation2 [shape = 'u8[8192]{0}', space=vmem, size = 0x2000, scoped, tag = 'input window, operand 0, single buffered']
    #allocation3 [shape = 's32[1]{0}', space=sflag, size = 0x4, scoped, tag = 'scoped memory for tpu_custom_call.1']
    #allocation4 [shape = 's32[1]{0}', space=sflag, size = 0x4, scoped, tag = 'scoped memory for tpu_custom_call.1']
    #allocation5 [shape = 'u8[8192]{0}', space=vmem, size = 0x2000, scoped, tag = 'output window, operand 0, single buffered']
    #allocation6 [shape = 'u8[8192]{0}', space=vmem, size = 0x2000, scoped, tag = 'output window, operand 1, single buffered']
    #allocation7 [shape = 's32[1]{0}', space=sflag, size = 0x4, scoped, tag = 'scoped memory for tpu_custom_call.1']
    #allocation8 [shape = 'u8[8192]{0}', space=vmem, size = 0x2000, scoped, tag = 'output window, operand 2, single buffered']
    #allocation9 [shape = 'u8[8192]{0}', space=vmem, size = 0x2000, scoped, tag = 'output window, operand 3, single buffered']
    #allocation10 [shape = 's32[1]{0}', space=sflag, size = 0x4, scoped, tag = 'scoped memory for tpu_custom_call.1']
    #allocation11 [shape = 'u8[4096]{0}', space=vmem, size = 0x1000, scoped, tag = 'output window, operand 4, single buffered']
    %11 = vsyncpa [#allocation3], 0
    %12 = vsyncpa [#allocation4], 0
    %13 = vsyncpa [#allocation7], 0
    %14 = vsyncpa [#allocation10], 0
    // Predicated region
    $region2: #{tpu_custom_call.1} parent=1 // pred_check
      _
    $region3: #{tpu_custom_call.1} parent=1 // pred_check_branch
      %16 = sbr.rel (0) target = $region5
    $region4: #{tpu_custom_call.1} parent=1 // pred_region
      %s18 = ssub.s32 256, 256
      %19 = vsyncadd [#allocation3], %s18
      %s21 = sshll.u32 [#allocation2], 4
      %s22 = int_to_ptr.vmem [resolvable:$true] %s21
      %24 = dma.hbm_to_vmem [thread:$0]  %s0, 256, %s22, [#allocation3]
    $region5: #{tpu_custom_call.1} parent=1 // pred_fallthru
      _
    // Predicated region
    $region6: #{tpu_custom_call.1} parent=1 // pred_check
      _
    $region7: #{tpu_custom_call.1} parent=1 // pred_check_branch
      %26 = sbr.rel (0) target = $region9
    $region8: #{tpu_custom_call.1} parent=1 // pred_region
      %27 = dma.done [#allocation3], 256
    $region9: #{tpu_custom_call.1} parent=1 // pred_fallthru
      _
    %v28 = vld [vmem:[#allocation2] sm:$0xff]
    %v29 = vld [vmem:[#allocation2 + $0x8] sm:$0xff]
    %v30 = vadd.f32 %v28, 1.0
    %v31 = vadd.f32 %v29, 1.0
    %32 = vst [vmem:[#allocation5] sm:$0xff] %v30
    %33 = vst [vmem:[#allocation5 + $0x8] sm:$0xff] %v31
    %v34 = vsub.f32 %v28, 1.0
    %v35 = vsub.f32 %v29, 1.0
    %36 = vst [vmem:[#allocation6] sm:$0xff] %v34
    %37 = vst [vmem:[#allocation6 + $0x8] sm:$0xff] %v35
    %v38 = vmul.f32 %v28, 2.0
    %v39 = vmul.f32 %v29, 2.0
    %40 = vst [vmem:[#allocation8] sm:$0xff] %v38
    %41 = vst [vmem:[#allocation8 + $0x8] sm:$0xff] %v39
    %v42 = vmul.f32 %v28, 0.5
    %v43 = vmul.f32 %v29, 0.5
    %44 = vst [vmem:[#allocation9] sm:$0xff] %v42
    %45 = vst [vmem:[#allocation9 + $0x8] sm:$0xff] %v43
    %v48 = vcombine.high %v28, %v28
    %v50 = vunpack.c.l.s4 1983009808
    %v51 = vunpack.c.0.s8 %v50
    %v52 = vlaneseq
    %v53 = vshrl.u32 %v52, 7
    %v54 = vsub.s32 %v51, %v53
    %v55 = vrot.slane %v28, %v54
    %v57 = vunpack.c.l.s4 1983009808
    %v58 = vunpack.c.0.s8 %v57
    %v59 = vlaneseq
    %v60 = vshrl.u32 %v59, 7
    %v61 = vsub.s32 %v58, %v60
    %v62 = vrot.slane %v48, %v61
    %v63 = vcombine.high %v55, %v55
    %v64 = vcombine.high %v62, %v62
    %v65 = vcombine.high %v29, %v29
    %v67 = vunpack.c.l.s4 1983009808
    %v68 = vunpack.c.0.s8 %v67
    %v69 = vlaneseq
    %v70 = vshrl.u32 %v69, 7
    %v71 = vsub.s32 %v68, %v70
    %v72 = vrot.slane %v29, %v71
    %v74 = vunpack.c.l.s4 1983009808
    %v75 = vunpack.c.0.s8 %v74
    %v76 = vlaneseq
    %v77 = vshrl.u32 %v76, 7
    %v78 = vsub.s32 %v75, %v77
    %v79 = vrot.slane %v65, %v78
    %v80 = vcombine.high %v72, %v72
    %v81 = vcombine.high %v79, %v79
    %vm90 = vcmask 1041408
    %v91 = vsel %vm90, %v55, 0.0
    %v92 = vrot.slane %v91, 4
    %v93 = vadd.f32 %v91, %v92
    %v94 = vrot.slane %v93, 2
    %v95 = vadd.f32 %v93, %v94
    %v96 = vrot.slane %v95, 1
    %v97 = vadd.f32 %v95, %v96
    %v98 = vsel %vm90, %v63, 0.0
    %v99 = vrot.slane %v98, 4
    %v100 = vadd.f32 %v98, %v99
    %v101 = vrot.slane %v100, 2
    %v102 = vadd.f32 %v100, %v101
    %v103 = vrot.slane %v102, 1
    %v104 = vadd.f32 %v102, %v103
    %v105 = vsel %vm90, %v62, 0.0
    %v106 = vrot.slane %v105, 4
    %v107 = vadd.f32 %v105, %v106
    %v108 = vrot.slane %v107, 2
    %v109 = vadd.f32 %v107, %v108
    %v110 = vrot.slane %v109, 1
    %v111 = vadd.f32 %v109, %v110
    %v112 = vsel %vm90, %v64, 0.0
    %v113 = vrot.slane %v112, 4
    %v114 = vadd.f32 %v112, %v113
    %v115 = vrot.slane %v114, 2
    %v116 = vadd.f32 %v114, %v115
    %v117 = vrot.slane %v116, 1
    %v118 = vadd.f32 %v116, %v117
    %v119 = vsel %vm90, %v72, 0.0
    %v120 = vrot.slane %v119, 4
    %v121 = vadd.f32 %v119, %v120
    %v122 = vrot.slane %v121, 2
    %v123 = vadd.f32 %v121, %v122
    %v124 = vrot.slane %v123, 1
    %v125 = vadd.f32 %v123, %v124
    %v126 = vsel %vm90, %v80, 0.0
    %v127 = vrot.slane %v126, 4
    %v128 = vadd.f32 %v126, %v127
    %v129 = vrot.slane %v128, 2
    %v130 = vadd.f32 %v128, %v129
    %v131 = vrot.slane %v130, 1
    %v132 = vadd.f32 %v130, %v131
    %v133 = vsel %vm90, %v79, 0.0
    %v134 = vrot.slane %v133, 4
    %v135 = vadd.f32 %v133, %v134
    %v136 = vrot.slane %v135, 2
    %v137 = vadd.f32 %v135, %v136
    %v138 = vrot.slane %v137, 1
    %v139 = vadd.f32 %v137, %v138
    %v140 = vsel %vm90, %v81, 0.0
    %v141 = vrot.slane %v140, 4
    %v142 = vadd.f32 %v140, %v141
    %v143 = vrot.slane %v142, 2
    %v144 = vadd.f32 %v142, %v143
    %v145 = vrot.slane %v144, 1
    %v146 = vadd.f32 %v144, %v145
    %v155 = vcombine.low %v97, %v104
    %v156 = vcombine.low %v111, %v118
    %v157 = vcombine.low %v125, %v132
    %v158 = vcombine.low %v139, %v146
    %v160 = vunpack.c.l.s4 1966171168
    %v161 = vunpack.c.0.s8 %v160
    %v162 = vlaneseq
    %v163 = vshrl.u32 %v162, 7
    %v164 = vsub.s32 %v161, %v163
    %v165 = vrot.slane %v155, %v164
    %v167 = vunpack.c.l.s4 1966171168
    %v168 = vunpack.c.0.s8 %v167
    %v169 = vlaneseq
    %v170 = vshrl.u32 %v169, 7
    %v171 = vsub.s32 %v168, %v170
    %v172 = vrot.slane %v156, %v171
    %v174 = vunpack.c.l.s4 1966171168
    %v175 = vunpack.c.0.s8 %v174
    %v176 = vlaneseq
    %v177 = vshrl.u32 %v176, 7
    %v178 = vsub.s32 %v175, %v177
    %v179 = vrot.slane %v157, %v178
    %v181 = vunpack.c.l.s4 1966171168
    %v182 = vunpack.c.0.s8 %v181
    %v183 = vlaneseq
    %v184 = vshrl.u32 %v183, 7
    %v185 = vsub.s32 %v182, %v184
    %v186 = vrot.slane %v158, %v185
    %v187 = vcombine.low %v165, %v172
    %v188 = vcombine.low %v179, %v186
    %v190 = vunpack.c.l.s4 1966171168
    %v191 = vunpack.c.0.s8 %v190
    %v192 = vlaneseq
    %v193 = vshrl.u32 %v192, 7
    %v194 = vsub.s32 %v191, %v193
    %v195 = vrot.slane %v187, %v194
    %v197 = vunpack.c.l.s4 1966171168
    %v198 = vunpack.c.0.s8 %v197
    %v199 = vlaneseq
    %v200 = vshrl.u32 %v199, 7
    %v201 = vsub.s32 %v198, %v200
    %v202 = vrot.slane %v188, %v201
    %v203 = vcombine.low %v195, %v202
    %205 = vst [vmem:[#allocation11] sm:$0xff] %v203
    // Predicated region
    $region10: #{tpu_custom_call.1} parent=1 // pred_check
      _
    $region11: #{tpu_custom_call.1} parent=1 // pred_check_branch
      %207 = sbr.rel (0) target = $region13
    $region12: #{tpu_custom_call.1} parent=1 // pred_region
      %s209 = ssub.s32 256, 256
      %210 = vsyncadd [#allocation4], %s209
      %s212 = sshll.u32 [#allocation5], 4
      %s213 = int_to_ptr.vmem [resolvable:$true] %s212
      %215 = dma.vmem_to_hbm [thread:$0]  %s213, 256, %s1, [#allocation4]
    $region13: #{tpu_custom_call.1} parent=1 // pred_fallthru
      _
    // Predicated region
    $region14: #{tpu_custom_call.1} parent=1 // pred_check
      _
    $region15: #{tpu_custom_call.1} parent=1 // pred_check_branch
      %217 = sbr.rel (0) target = $region17
    $region16: #{tpu_custom_call.1} parent=1 // pred_region
      %s219 = ssub.s32 256, 256
      %220 = vsyncadd [#allocation7], %s219
      %s222 = sshll.u32 [#allocation6], 4
      %s223 = int_to_ptr.vmem [resolvable:$true] %s222
      %225 = dma.vmem_to_hbm [thread:$0]  %s223, 256, %s2, [#allocation7]
    $region17: #{tpu_custom_call.1} parent=1 // pred_fallthru
      _
    // Predicated region
    $region18: #{tpu_custom_call.1} parent=1 // pred_check
      _
    $region19: #{tpu_custom_call.1} parent=1 // pred_check_branch
      %227 = sbr.rel (0) target = $region21
    $region20: #{tpu_custom_call.1} parent=1 // pred_region
      %s229 = ssub.s32 256, 256
      %230 = vsyncadd [#allocation7], %s229
      %s232 = sshll.u32 [#allocation8], 4
      %s233 = int_to_ptr.vmem [resolvable:$true] %s232
      %235 = dma.vmem_to_hbm [thread:$0]  %s233, 256, %s3, [#allocation7]
    $region21: #{tpu_custom_call.1} parent=1 // pred_fallthru
      _
    // Predicated region
    $region22: #{tpu_custom_call.1} parent=1 // pred_check
      _
    $region23: #{tpu_custom_call.1} parent=1 // pred_check_branch
      %237 = sbr.rel (0) target = $region25
    $region24: #{tpu_custom_call.1} parent=1 // pred_region
      %s239 = ssub.s32 256, 256
      %240 = vsyncadd [#allocation10], %s239
      %s242 = sshll.u32 [#allocation9], 4
      %s243 = int_to_ptr.vmem [resolvable:$true] %s242
      %245 = dma.vmem_to_hbm [thread:$0]  %s243, 256, %s4, [#allocation10]
    $region25: #{tpu_custom_call.1} parent=1 // pred_fallthru
      _
    // Predicated region
    $region26: #{tpu_custom_call.1} parent=1 // pred_check
      _
    $region27: #{tpu_custom_call.1} parent=1 // pred_check_branch
      %247 = sbr.rel (0) target = $region29
    $region28: #{tpu_custom_call.1} parent=1 // pred_region
      %s249 = ssub.s32 128, 128
      %250 = vsyncadd [#allocation10], %s249
      %s252 = sshll.u32 [#allocation11], 4
      %s253 = int_to_ptr.vmem [resolvable:$true] %s252
      %255 = dma.vmem_to_hbm [thread:$0]  %s253, 128, %s5, [#allocation10]
    $region29: #{tpu_custom_call.1} parent=1 // pred_fallthru
      _
    // Predicated region
    $region30: #{tpu_custom_call.1} parent=1 // pred_check
      _
    $region31: #{tpu_custom_call.1} parent=1 // pred_check_branch
      %257 = sbr.rel (0) target = $region33
    $region32: #{tpu_custom_call.1} parent=1 // pred_region
      %258 = dma.done [#allocation4], 256
    $region33: #{tpu_custom_call.1} parent=1 // pred_fallthru
      _
    // Predicated region
    $region34: #{tpu_custom_call.1} parent=1 // pred_check
      _
    $region35: #{tpu_custom_call.1} parent=1 // pred_check_branch
      %260 = sbr.rel (0) target = $region37
    $region36: #{tpu_custom_call.1} parent=1 // pred_region
      %261 = dma.done [#allocation7], 256
    $region37: #{tpu_custom_call.1} parent=1 // pred_fallthru
      _
    // Predicated region
    $region38: #{tpu_custom_call.1} parent=1 // pred_check
      _
    $region39: #{tpu_custom_call.1} parent=1 // pred_check_branch
      %263 = sbr.rel (0) target = $region41
    $region40: #{tpu_custom_call.1} parent=1 // pred_region
      %264 = dma.done [#allocation7], 256
    $region41: #{tpu_custom_call.1} parent=1 // pred_fallthru
      _
    // Predicated region
    $region42: #{tpu_custom_call.1} parent=1 // pred_check
      _
    $region43: #{tpu_custom_call.1} parent=1 // pred_check_branch
      %266 = sbr.rel (0) target = $region45
    $region44: #{tpu_custom_call.1} parent=1 // pred_region
      %267 = dma.done [#allocation10], 256
    $region45: #{tpu_custom_call.1} parent=1 // pred_fallthru
      _
    // Predicated region
    $region46: #{tpu_custom_call.1} parent=1 // pred_check
      _
    $region47: #{tpu_custom_call.1} parent=1 // pred_check_branch
      %269 = sbr.rel (0) target = $region49
    $region48: #{tpu_custom_call.1} parent=1 // pred_region
      %270 = dma.done [#allocation10], 128
    $region49: #{tpu_custom_call.1} parent=1 // pred_fallthru
      _
    %271 = vsyncpa [#allocation3], 1
    %272 = vsyncpa [#allocation4], 1
    %273 = vsyncpa [#allocation7], 1
    %274 = vsyncpa [#allocation10], 1

</llo_original>
